<compile_context>
chip_gen: v7x
topology: tpu7x:2x2x1
jax: 0.10.0
libtpu: 0.0.40
codegen_flags: <defaults>
</compile_context>

<pallas_src>
import jax
import jax.numpy as jnp
from jax.experimental import pallas as pl
from jax.experimental.pallas import tpu as pltpu


def _yolo_kernel(w_ref, p_ref, coef_ref, gx_ref, gy_ref, out_ref, box_ref):
    # w_ref:    (C_out, K)     fused conv weight (bias folded into last column)
    # p_ref:    (K, TM)        im2col patches^T (pixels on the lane axis)
    # coef_ref: (5, C_out, 1)  per-channel decode coefficients
    #                          [cs, ce, xmask, ymask, sigmask]
    # gx_ref:   (1, TM)        grid_x / W per pixel
    # gy_ref:   (1, TM)        grid_y / H per pixel
    # out_ref, box_ref: (C_out, TM)

    # Single MXU matmul = 3x3 same conv + bias for every pixel in this block.
    pred = jnp.dot(w_ref[...], p_ref[...], preferred_element_type=jnp.float32)

    cs = coef_ref[0]   # sigmoid scale: 1/W (x), 1/H (y), 1 (conf), 0 (w,h)
    ce = coef_ref[1]   # exp scale:     anchor_w (w), anchor_h (h), else 0
    xm = coef_ref[2]   # 1 on the x channel, else 0
    ym = coef_ref[3]   # 1 on the y channel, else 0
    sm = coef_ref[4]   # 1 on sigmoid channels (x, y, conf), else 0

    sig = jax.nn.sigmoid(pred)
    # exp only contributes on the w/h channels; zero its input elsewhere so a
    # large x/y/conf logit can never produce inf * 0 = NaN.
    ex = jnp.exp(pred * (1.0 - sm))

    # "output" tensor: sigmoid on x/y/conf, raw logits on w/h.
    out_ref[...] = jnp.where(sm > 0.5, sig, pred)
    # decoded boxes: two coefficient FMAs + grid offsets (no 4-deep where chain)
    box_ref[...] = sig * cs + ex * ce + gx_ref[...] * xm + gy_ref[...] * ym


def yolo_layer_forward(x_nchw, weight_oihw, bias, anchors, *, tile_m=None):
    """Pallas implementation of YOLOLayer.forward.

    x_nchw:      (N, C_in, H, W) float32
    weight_oihw: (A*5, C_in, 3, 3) float32  (nn.Conv2d weight layout)
    bias:        (A*5,) float32
    anchors:     (A, 2) float32
    Returns (output (N, H, W, A, 5), boxes (N, H*W*A, 5)).
    """
    N, C_in, H, W = x_nchw.shape
    A = anchors.shape[0]
    C_out = A * 5
    assert weight_oihw.shape == (C_out, C_in, 3, 3)

    M = N * H * W                        # all pixels of the whole batch
    K = 9 * C_in + 1                     # 3x3 taps * C_in, +1 ones row for bias
    K_pad = ((K + 7) // 8) * 8           # keep the contraction dim 8-aligned

    if tile_m is None:
        tile_m = M                       # single grid step (best on v5e/v6e)
    assert M % tile_m == 0 and (tile_m == M or tile_m % 128 == 0)

    # ---- trace-time glue: layout, im2col, fused weight, decode tables ----
    x_nhwc = jnp.transpose(x_nchw, (0, 2, 3, 1))
    x_pad = jnp.pad(x_nhwc, ((0, 0), (1, 1), (1, 1), (0, 0)))

    # im2col: P[m, tap*C_in + c] = x_pad[n, h+dy, w+dx, c],  tap = dy*3 + dx
    taps = [x_pad[:, dy:dy + H, dx:dx + W, :]
            for dy in range(3) for dx in range(3)]            # 9 x (N,H,W,C_in)
    patches = jnp.stack(taps, axis=3).reshape(M, 9 * C_in)
    patches = jnp.concatenate(
        [patches, jnp.ones((M, 1), jnp.float32)], axis=1)     # ones col -> bias
    patches = jnp.pad(patches, ((0, 0), (0, K_pad - K)))
    p_t = patches.T                                            # (K_pad, M)

    # fused weight: Wf[o, (dy*3+dx)*C_in + c] = w[o, c, dy, dx], bias appended.
    w_f = jnp.transpose(weight_oihw, (0, 2, 3, 1)).reshape(C_out, 9 * C_in)
    w_f = jnp.concatenate([w_f, bias[:, None]], axis=1)
    w_f = jnp.pad(w_f, ((0, 0), (0, K_pad - K)))               # (C_out, K_pad)

    # per-channel decode coefficients (k = c % 5 field index, a = c // 5 anchor)
    k_idx = jnp.arange(C_out) % 5
    a_idx = jnp.arange(C_out) // 5
    cs = jnp.where(k_idx == 0, 1.0 / W,
         jnp.where(k_idx == 1, 1.0 / H,
         jnp.where(k_idx == 4, 1.0, 0.0))).astype(jnp.float32)
    ce = jnp.where(k_idx == 2, anchors[a_idx, 0],
         jnp.where(k_idx == 3, anchors[a_idx, 1], 0.0)).astype(jnp.float32)
    xm = (k_idx == 0).astype(jnp.float32)
    ym = (k_idx == 1).astype(jnp.float32)
    sm = ((k_idx == 0) | (k_idx == 1) | (k_idx == 4)).astype(jnp.float32)
    coef = jnp.stack([cs, ce, xm, ym, sm], axis=0).reshape(5, C_out, 1)

    # per-pixel grid offsets, pre-divided by the grid size (trace-time divides)
    gx = jnp.broadcast_to(jnp.arange(W, dtype=jnp.float32)[None, None, :],
                          (N, H, W)).reshape(1, M) / W
    gy = jnp.broadcast_to(jnp.arange(H, dtype=jnp.float32)[None, :, None],
                          (N, H, W)).reshape(1, M) / H

    out_t, box_t = pl.pallas_call(
        _yolo_kernel,
        out_shape=(
            jax.ShapeDtypeStruct((C_out, M), jnp.float32),
            jax.ShapeDtypeStruct((C_out, M), jnp.float32),
        ),
        grid_spec=pltpu.PrefetchScalarGridSpec(
            num_scalar_prefetch=0,
            grid=(M // tile_m,),
            in_specs=[
                pl.BlockSpec((C_out, K_pad), lambda i: (0, 0)),     # fused weight
                pl.BlockSpec((K_pad, tile_m), lambda i: (0, i)),    # im2col^T
                pl.BlockSpec((5, C_out, 1), lambda i: (0, 0, 0)),   # decode coefs
                pl.BlockSpec((1, tile_m), lambda i: (0, i)),        # gx / W
                pl.BlockSpec((1, tile_m), lambda i: (0, i)),        # gy / H
            ],
            out_specs=[
                pl.BlockSpec((C_out, tile_m), lambda i: (0, i)),
                pl.BlockSpec((C_out, tile_m), lambda i: (0, i)),
            ],
        ),
        compiler_params=pltpu.CompilerParams(
            dimension_semantics=("parallel",)),
    )(w_f, p_t, coef, gx, gy)

    # glue: back to the module's output layouts (channel c = a*5 + k)
    output = out_t.T.reshape(N, H, W, A, 5)
    boxes = box_t.T.reshape(N, H * W * A, 5)
    return output, boxes


def _reference(x_nchw, weight_oihw, bias, anchors):
    """Pure-JAX reference mirroring the PyTorch forward exactly."""
    N, C_in, H, W = x_nchw.shape
    A = anchors.shape[0]
    conv = jax.lax.conv_general_dilated(
        x_nchw, weight_oihw, window_strides=(1, 1),
        padding=((1, 1), (1, 1)),
        dimension_numbers=("NCHW", "OIHW", "NCHW"))
    conv = conv + bias[None, :, None, None]
    pred = conv.reshape(N, A, 5, H, W).transpose(0, 3, 4, 1, 2)  # (N,H,W,A,5)
    sx = jax.nn.sigmoid(pred[..., 0])
    sy = jax.nn.sigmoid(pred[..., 1])
    w_ = pred[..., 2]
    h_ = pred[..., 3]
    conf = jax.nn.sigmoid(pred[..., 4:5])
    gx = jnp.arange(W, dtype=jnp.float32)[None, None, :, None]
    gy = jnp.arange(H, dtype=jnp.float32)[None, :, None, None]
    bx = (sx + gx) / W
    by = (sy + gy) / H
    bw = jnp.exp(w_) * anchors[:, 0][None, None, None, :]
    bh = jnp.exp(h_) * anchors[:, 1][None, None, None, :]
    output = jnp.concatenate([jnp.stack([sx, sy, w_, h_], -1), conf], -1)
    boxes = jnp.concatenate([jnp.stack([bx, by, bw, bh], -1), conf], -1)
    return output, boxes.reshape(N, -1, 5)


if __name__ == "__main__":
    key = jax.random.PRNGKey(0)
    k_x, k_w, k_b = jax.random.split(key, 3)

    N, C_in, H, W = 2, 4, 16, 16          # batch=2, places=4, 16x16 feature map
    anchors = jnp.array([[0.10, 0.20],
                         [0.30, 0.45],
                         [0.55, 0.70]], dtype=jnp.float32)   # 3 anchors
    A = anchors.shape[0]
    C_out = A * 5

    x = jax.random.normal(k_x, (N, C_in, H, W), dtype=jnp.float32)
    weight = 0.1 * jax.random.normal(k_w, (C_out, C_in, 3, 3), dtype=jnp.float32)
    bias = 0.05 * jax.random.normal(k_b, (C_out,), dtype=jnp.float32)

    out, boxes = yolo_layer_forward(x, weight, bias, anchors)
    jax.block_until_ready((out, boxes))

    ref_out, ref_boxes = _reference(x, weight, bias, anchors)
    assert out.shape == (N, H, W, A, 5)
    assert boxes.shape == (N, H * W * A, 5)
    assert jnp.allclose(out, ref_out, rtol=1e-5, atol=1e-5)
    assert jnp.allclose(boxes, ref_boxes, rtol=1e-5, atol=1e-5)

    print("KERNEL_OK")
</pallas_src>

<mosaic_0001>
module attributes {stable_mosaic.version = 11 : i64} {
  func.func @_yolo_kernel(%arg0: i32, %arg1: memref<15x40xf32, #tpu.memory_space<vmem>>, %arg2: memref<40x512xf32, #tpu.memory_space<vmem>>, %arg3: memref<5x15x1xf32, #tpu.memory_space<vmem>>, %arg4: memref<1x512xf32, #tpu.memory_space<vmem>>, %arg5: memref<1x512xf32, #tpu.memory_space<vmem>>, %arg6: memref<15x512xf32, #tpu.memory_space<vmem>>, %arg7: memref<15x512xf32, #tpu.memory_space<vmem>>) attributes {dimension_semantics = [#tpu.dimension_semantics<parallel>], iteration_bounds = array<i64: 1>, scalar_prefetch = 0 : i64, scratch_operands = 0 : i64, tpu.core_type = #tpu.core_type<tc>, window_params = [{pipeline_mode = #tpu.pipeline_mode<synchronous>, transform_indices = @transform_0, window_bounds = array<i64: 15, 40>}, {transform_indices = @transform_1, window_bounds = array<i64: 40, 512>}, {pipeline_mode = #tpu.pipeline_mode<synchronous>, transform_indices = @transform_2, window_bounds = array<i64: 5, 15, 1>}, {transform_indices = @transform_3, window_bounds = array<i64: 1, 512>}, {transform_indices = @transform_4, window_bounds = array<i64: 1, 512>}, {transform_indices = @transform_5, window_bounds = array<i64: 15, 512>}, {transform_indices = @transform_6, window_bounds = array<i64: 15, 512>}]} {
    %c0 = arith.constant 0 : index
    %c0_0 = arith.constant 0 : index
    %0 = vector.load %arg1[%c0, %c0_0] : memref<15x40xf32, #tpu.memory_space<vmem>>, vector<15x40xf32>
    %c0_1 = arith.constant 0 : index
    %c0_2 = arith.constant 0 : index
    %1 = vector.load %arg2[%c0_1, %c0_2] : memref<40x512xf32, #tpu.memory_space<vmem>>, vector<40x512xf32>
    %cst = arith.constant dense<0.000000e+00> : vector<15x512xf32>
    %2 = tpu.matmul %0, %1, %cst {dimension_numbers = #tpu.dot_dimension_numbers<[1], [0], [0], [1], [0, 0, 1, 1], [], []>} : vector<15x40xf32>, vector<40x512xf32>, vector<15x512xf32> -> vector<15x512xf32>
    %c0_3 = arith.constant 0 : index
    %c0_4 = arith.constant 0 : index
    %c0_5 = arith.constant 0 : index
    %3 = vector.load %arg3[%c0_3, %c0_4, %c0_5] : memref<5x15x1xf32, #tpu.memory_space<vmem>>, vector<1x15x1xf32>
    %4 = vector.shape_cast %3 : vector<1x15x1xf32> to vector<15x1xf32>
    %c1 = arith.constant 1 : index
    %c0_6 = arith.constant 0 : index
    %c0_7 = arith.constant 0 : index
    %5 = vector.load %arg3[%c1, %c0_6, %c0_7] : memref<5x15x1xf32, #tpu.memory_space<vmem>>, vector<1x15x1xf32>
    %6 = vector.shape_cast %5 : vector<1x15x1xf32> to vector<15x1xf32>
    %c2 = arith.constant 2 : index
    %c0_8 = arith.constant 0 : index
    %c0_9 = arith.constant 0 : index
    %7 = vector.load %arg3[%c2, %c0_8, %c0_9] : memref<5x15x1xf32, #tpu.memory_space<vmem>>, vector<1x15x1xf32>
    %8 = vector.shape_cast %7 : vector<1x15x1xf32> to vector<15x1xf32>
    %c3 = arith.constant 3 : index
    %c0_10 = arith.constant 0 : index
    %c0_11 = arith.constant 0 : index
    %9 = vector.load %arg3[%c3, %c0_10, %c0_11] : memref<5x15x1xf32, #tpu.memory_space<vmem>>, vector<1x15x1xf32>
    %10 = vector.shape_cast %9 : vector<1x15x1xf32> to vector<15x1xf32>
    %c4 = arith.constant 4 : index
    %c0_12 = arith.constant 0 : index
    %c0_13 = arith.constant 0 : index
    %11 = vector.load %arg3[%c4, %c0_12, %c0_13] : memref<5x15x1xf32, #tpu.memory_space<vmem>>, vector<1x15x1xf32>
    %12 = vector.shape_cast %11 : vector<1x15x1xf32> to vector<15x1xf32>
    %13 = arith.negf %2 : vector<15x512xf32>
    %14 = math.exp %13 : vector<15x512xf32>
    %cst_14 = arith.constant 1.000000e+00 : f32
    %15 = vector.broadcast %cst_14 : f32 to vector<15x512xf32>
    %16 = arith.addf %15, %14 : vector<15x512xf32>
    %17 = arith.divf %15, %16 : vector<15x512xf32>
    %cst_15 = arith.constant 1.000000e+00 : f32
    %18 = vector.broadcast %cst_15 : f32 to vector<15x1xf32>
    %19 = arith.subf %18, %12 : vector<15x1xf32>
    %20 = vector.broadcast %19 : vector<15x1xf32> to vector<15x512xf32>
    %21 = arith.mulf %2, %20 : vector<15x512xf32>
    %22 = math.exp %21 : vector<15x512xf32>
    %cst_16 = arith.constant 5.000000e-01 : f32
    %23 = vector.broadcast %cst_16 : f32 to vector<15x1xf32>
    %24 = arith.cmpf ogt, %12, %23 : vector<15x1xf32>
    %25 = vector.shape_cast %24 : vector<15x1xi1> to vector<15x1xi1>
    %26 = vector.broadcast %25 : vector<15x1xi1> to vector<15x512xi1>
    %27 = arith.select %26, %17, %2 : vector<15x512xi1>, vector<15x512xf32>
    %c0_17 = arith.constant 0 : index
    %c0_18 = arith.constant 0 : index
    %28 = vector.load %arg6[%c0_17, %c0_18] : memref<15x512xf32, #tpu.memory_space<vmem>>, vector<15x512xf32>
    tpu.vector_store %arg6[%c0_17, %c0_18], %27 {strides = array<i32>} : memref<15x512xf32, #tpu.memory_space<vmem>>, vector<15x512xf32>,
    %29 = vector.broadcast %4 : vector<15x1xf32> to vector<15x512xf32>
    %30 = arith.mulf %17, %29 : vector<15x512xf32>
    %31 = vector.broadcast %6 : vector<15x1xf32> to vector<15x512xf32>
    %32 = arith.mulf %22, %31 : vector<15x512xf32>
    %33 = arith.addf %30, %32 : vector<15x512xf32>
    %c0_19 = arith.constant 0 : index
    %c0_20 = arith.constant 0 : index
    %34 = vector.load %arg4[%c0_19, %c0_20] : memref<1x512xf32, #tpu.memory_space<vmem>>, vector<1x512xf32>
    %35 = vector.broadcast %34 : vector<1x512xf32> to vector<15x512xf32>
    %36 = vector.broadcast %8 : vector<15x1xf32> to vector<15x512xf32>
    %37 = arith.mulf %35, %36 : vector<15x512xf32>
    %38 = arith.addf %33, %37 : vector<15x512xf32>
    %c0_21 = arith.constant 0 : index
    %c0_22 = arith.constant 0 : index
    %39 = vector.load %arg5[%c0_21, %c0_22] : memref<1x512xf32, #tpu.memory_space<vmem>>, vector<1x512xf32>
    %40 = vector.broadcast %39 : vector<1x512xf32> to vector<15x512xf32>
    %41 = vector.broadcast %10 : vector<15x1xf32> to vector<15x512xf32>
    %42 = arith.mulf %40, %41 : vector<15x512xf32>
    %43 = arith.addf %38, %42 : vector<15x512xf32>
    %c0_23 = arith.constant 0 : index
    %c0_24 = arith.constant 0 : index
    %44 = vector.load %arg7[%c0_23, %c0_24] : memref<15x512xf32, #tpu.memory_space<vmem>>, vector<15x512xf32>
    tpu.vector_store %arg7[%c0_23, %c0_24], %43 {strides = array<i32>} : memref<15x512xf32, #tpu.memory_space<vmem>>, vector<15x512xf32>,
    return
  }
  func.func @transform_0(%arg0: i32) -> (i32, i32) {
    %c0_i32 = arith.constant 0 : i32
    %c0_i32_0 = arith.constant 0 : i32
    %c0_i32_1 = arith.constant 0 : i32
    return %c0_i32, %c0_i32_0 : i32, i32
  }
  func.func @transform_1(%arg0: i32) -> (i32, i32) {
    %c0_i32 = arith.constant 0 : i32
    %c0_i32_0 = arith.constant 0 : i32
    return %c0_i32, %arg0 : i32, i32
  }
  func.func @transform_2(%arg0: i32) -> (i32, i32, i32) {
    %c0_i32 = arith.constant 0 : i32
    %c0_i32_0 = arith.constant 0 : i32
    %c0_i32_1 = arith.constant 0 : i32
    %c0_i32_2 = arith.constant 0 : i32
    return %c0_i32, %c0_i32_0, %c0_i32_1 : i32, i32, i32
  }
  func.func @transform_3(%arg0: i32) -> (i32, i32) {
    %c0_i32 = arith.constant 0 : i32
    %c0_i32_0 = arith.constant 0 : i32
    return %c0_i32, %arg0 : i32, i32
  }
  func.func @transform_4(%arg0: i32) -> (i32, i32) {
    %c0_i32 = arith.constant 0 : i32
    %c0_i32_0 = arith.constant 0 : i32
    return %c0_i32, %arg0 : i32, i32
  }
  func.func @transform_5(%arg0: i32) -> (i32, i32) {
    %c0_i32 = arith.constant 0 : i32
    %c0_i32_0 = arith.constant 0 : i32
    return %c0_i32, %arg0 : i32, i32
  }
  func.func @transform_6(%arg0: i32) -> (i32, i32) {
    %c0_i32 = arith.constant 0 : i32
    %c0_i32_0 = arith.constant 0 : i32
    return %c0_i32, %arg0 : i32, i32
  }
}

</mosaic_0001>

<llo_original>
// kernel: tpu_custom_call.1
$region0: #{tpu_custom_call.1}
  #allocation0 [shape = 'u32[]', space=smem, size = 0x4, offset = 0x4, fixed_abs, tag = 'smem constant byte address 0x4 - core index']
  #allocation1 [shape = 'u32[144,128]{1,0:T(1,128)}', space=vmem, size = 0x12000, scoped, tag = 'internal scratch']
  %s0 = inlined_call_operand.vmem [shape: f32[15,40], index: 0, kind: input, shape index: {}]
  %s1 = inlined_call_operand.hbm [shape: f32[40,512], index: 1, kind: input, shape index: {}]
  %s2 = inlined_call_operand.vmem [shape: f32[5,15,1], index: 2, kind: input, shape index: {}]
  %s3 = inlined_call_operand.vmem [shape: f32[1,512], index: 3, kind: input, shape index: {}]
  %s4 = inlined_call_operand.vmem [shape: f32[1,512], index: 4, kind: input, shape index: {}]
  %s5 = inlined_call_operand.hbm [shape: f32[15,512], index: 5, kind: output, shape index: {0}]
  %s6 = inlined_call_operand.hbm [shape: f32[15,512], index: 6, kind: output, shape index: {1}]
  %7 = xla_tuple %s5, %s6
  %s8 = sld [smem:[#allocation0]]
  $region42: #{tpu_custom_call.1} parent=0
    _
  %s10 = ssub.s32 1, %s8
  %s11 = scalar_select 0, %s10, %s8
  $region1: #{tpu_custom_call.1} parent=0
    #allocation2 [shape = 'u8[81920]{0}', space=vmem, size = 0x14000, scoped, tag = 'input window, operand 1, single buffered']
    #allocation3 [shape = 's32[1]{0}', space=sflag, size = 0x4, scoped, tag = 'scoped memory for tpu_custom_call.1']
    #allocation4 [shape = 's32[1]{0}', space=sflag, size = 0x4, scoped, tag = 'scoped memory for tpu_custom_call.1']
    #allocation5 [shape = 'u8[32768]{0}', space=vmem, size = 0x8000, scoped, tag = 'output window, operand 0, single buffered']
    #allocation6 [shape = 'u8[32768]{0}', space=vmem, size = 0x8000, scoped, tag = 'output window, operand 1, single buffered']
    #allocation7 [shape = 's32[1]{0}', space=sflag, size = 0x4, scoped, tag = 'scoped memory for tpu_custom_call.1']
    %12 = vsyncpa [#allocation3], 0
    %13 = vsyncpa [#allocation4], 0
    %14 = vsyncpa [#allocation7], 0
    // Predicated region
    $region2: #{tpu_custom_call.1} parent=1 // pred_check
      _
    $region3: #{tpu_custom_call.1} parent=1 // pred_check_branch
      %16 = sbr.rel (0) target = $region5
    $region4: #{tpu_custom_call.1} parent=1 // pred_region
      _
    $region5: #{tpu_custom_call.1} parent=1 // pred_fallthru
      _
    // Predicated region
    $region6: #{tpu_custom_call.1} parent=1 // pred_check
      _
    $region7: #{tpu_custom_call.1} parent=1 // pred_check_branch
      %18 = sbr.rel (0) target = $region9
    $region8: #{tpu_custom_call.1} parent=1 // pred_region
      %s20 = ssub.s32 2560, 2560
      %21 = vsyncadd [#allocation3], %s20
      %s22 = sshll.u32 [#allocation2], 4
      %s23 = int_to_ptr.vmem [resolvable:$true] %s22
      %28 = dma.hbm_to_vmem [thread:$0]  %s1, 2560, %s23, [#allocation3], 512, 512, 32
    $region9: #{tpu_custom_call.1} parent=1 // pred_fallthru
      _
    // Predicated region
    $region10: #{tpu_custom_call.1} parent=1 // pred_check
      _
    $region11: #{tpu_custom_call.1} parent=1 // pred_check_branch
      %30 = sbr.rel (0) target = $region13
    $region12: #{tpu_custom_call.1} parent=1 // pred_region
      _
    $region13: #{tpu_custom_call.1} parent=1 // pred_fallthru
      _
    // Predicated region
    $region14: #{tpu_custom_call.1} parent=1 // pred_check
      _
    $region15: #{tpu_custom_call.1} parent=1 // pred_check_branch
      %32 = sbr.rel (0) target = $region17
    $region16: #{tpu_custom_call.1} parent=1 // pred_region
      _
    $region17: #{tpu_custom_call.1} parent=1 // pred_fallthru
      _
    // Predicated region
    $region18: #{tpu_custom_call.1} parent=1 // pred_check
      _
    $region19: #{tpu_custom_call.1} parent=1 // pred_check_branch
      %34 = sbr.rel (0) target = $region21
    $region20: #{tpu_custom_call.1} parent=1 // pred_region
      _
    $region21: #{tpu_custom_call.1} parent=1 // pred_fallthru
      _
    // Predicated region
    $region22: #{tpu_custom_call.1} parent=1 // pred_check
      _
    $region23: #{tpu_custom_call.1} parent=1 // pred_check_branch
      %36 = sbr.rel (0) target = $region25
    $region24: #{tpu_custom_call.1} parent=1 // pred_region
      %37 = dma.done [#allocation3], 2560
    $region25: #{tpu_custom_call.1} parent=1 // pred_fallthru
      _
    %v38 = vld [vmem:[%s0] sm:$0xff]
    %v39 = vld [vmem:[%s0 + $0x8] sm:$0x7f]
    %v40 = vld [vmem:[#allocation2] sm:$0xff]
    %v41 = vld [vmem:[#allocation2 + $0x8] sm:$0xff]
    %v42 = vld [vmem:[#allocation2 + $0x10] sm:$0xff]
    %v43 = vld [vmem:[#allocation2 + $0x18] sm:$0xff]
    %v44 = vld [vmem:[#allocation2 + $0x20] sm:$0xff]
    %v45 = vld [vmem:[#allocation2 + $0x28] sm:$0xff]
    %v46 = vld [vmem:[#allocation2 + $0x30] sm:$0xff]
    %v47 = vld [vmem:[#allocation2 + $0x38] sm:$0xff]
    %v48 = vld [vmem:[#allocation2 + $0x40] sm:$0xff]
    %v49 = vld [vmem:[#allocation2 + $0x48] sm:$0xff]
    %v50 = vld [vmem:[#allocation2 + $0x50] sm:$0xff]
    %v51 = vld [vmem:[#allocation2 + $0x58] sm:$0xff]
    %v52 = vld [vmem:[#allocation2 + $0x60] sm:$0xff]
    %v53 = vld [vmem:[#allocation2 + $0x68] sm:$0xff]
    %v54 = vld [vmem:[#allocation2 + $0x70] sm:$0xff]
    %v55 = vld [vmem:[#allocation2 + $0x78] sm:$0xff]
    %v56 = vld [vmem:[#allocation2 + $0x80] sm:$0xff]
    %v57 = vld [vmem:[#allocation2 + $0x88] sm:$0xff]
    %v58 = vld [vmem:[#allocation2 + $0x90] sm:$0xff]
    %v59 = vld [vmem:[#allocation2 + $0x98] sm:$0xff]
    %vm60 = vcmask 326656
    %v62 = vsel %vm60, %v38, 0
    %v65 = vsel %vm60, %v39, 0
    %67 = vmatprep.subr.mxu0 %v41
    %68 = vmatpush1.msra.mxu0 %v40
    %69 = vmatprep.subr.mxu0 %v45
    %70 = vmatpush1.msra.mxu0 %v44
    %71 = vmatprep.subr.mxu0 %v49
    %72 = vmatpush1.msra.mxu0 %v48
    %73 = vmatprep.subr.mxu0 %v53
    %74 = vmatpush1.msra.mxu0 %v52
    %75 = vmatprep.subr.mxu0 %v57
    %76 = vmatpush1.msra.mxu0 %v56
    %77 = vmatprep.subr.mxu0 0.0
    %78 = vmatpush1.msra.mxu0 0.0
    %79 = vmatprep.subr.mxu0 0.0
    %80 = vmatpush1.msra.mxu0 0.0
    %81 = vmatprep.subr.mxu0 0.0
    %82 = vmatpush1.msra.mxu0 0.0
    %83 = vmatprep.subr.mxu0 0.0
    %84 = vmatpush1.msra.mxu0 0.0
    %85 = vmatprep.subr.mxu0 0.0
    %86 = vmatpush1.msra.mxu0 0.0
    %87 = vmatprep.subr.mxu0 0.0
    %88 = vmatpush1.msra.mxu0 0.0
    %89 = vmatprep.subr.mxu0 0.0
    %90 = vmatpush1.msra.mxu0 0.0
    %91 = vmatprep.subr.mxu0 0.0
    %92 = vmatpush1.msra.mxu0 0.0
    %93 = vmatprep.subr.mxu0 0.0
    %94 = vmatpush1.msra.mxu0 0.0
    %95 = vmatprep.subr.mxu0 0.0
    %96 = vmatpush1.msra.mxu0 0.0
    %97 = vmatprep.subr.mxu0 0.0
    %98 = vmatpush1.msra.mxu0 0.0
    %99 = vmatprep.subr.mxu0 0.0
    %100 = vmatpush1.msra.mxu0 0.0
    %101 = vmatprep.subr.mxu0 0.0
    %102 = vmatpush1.msra.mxu0 0.0
    %103 = vmatprep.subr.mxu0 0.0
    %104 = vmatpush1.msra.mxu0 0.0
    %105 = vmatprep.subr.mxu0 0.0
    %106 = vmatpush1.msra.mxu0 0.0
    %107 = vmatprep.subr.mxu0 0.0
    %108 = vmatpush1.msra.mxu0 0.0
    %109 = vmatprep.subr.mxu0 0.0
    %110 = vmatpush1.msra.mxu0 0.0
    %111 = vmatprep.subr.mxu0 0.0
    %112 = vmatpush1.msra.mxu0 0.0
    %113 = vmatprep.subr.mxu0 0.0
    %114 = vmatpush1.msra.mxu0 0.0
    %115 = vmatprep.subr.mxu0 0.0
    %116 = vmatpush1.msra.mxu0 0.0
    %117 = vmatprep.subr.mxu0 0.0
    %118 = vmatpush1.msra.mxu0 0.0
    %119 = vmatprep.subr.mxu0 0.0
    %120 = vmatpush1.msra.mxu0 0.0
    %121 = vmatprep.subr.mxu0 0.0
    %122 = vmatpush1.msra.mxu0 0.0
    %123 = vmatprep.subr.mxu0 0.0
    %124 = vmatpush1.msra.mxu0 0.0
    %125 = vmatprep.subr.mxu0 0.0
    %126 = vmatpush1.msra.mxu0 0.0
    %127 = vmatprep.subr.mxu0 0.0
    %128 = vmatpush1.msra.mxu0 0.0
    %129 = vmatprep.subr.mxu0 0.0
    %130 = vmatpush1.msra.mxu0 0.0
    %131 = vmatprep.mubr.f32.mxu0 0.0
    %132 = vmatmul.mubr.f32.gmra.mrb[0].mxu0 %v62
    %v133 = vpop.f32.mrb[0].mxu0
    %v134 = vadd.f32 0.0, %v133
    %v135 = vpop.f32.mrb[0].mxu0
    %v136 = vadd.f32 0.0, %v135
    %137 = vmatprep.mubr.f32.mxu0 0.0
    %138 = vmatmul.mubr.f32.gmra.mrb[0].mxu0 %v65
    %v139 = vpop.f32.mrb[0].mxu0
    %v140 = vadd.f32 0.0, %v139
    %v141 = vpop.f32.mrb[0].mxu0
    %v142 = vadd.f32 0.0, %v141
    %143 = vdwg.mxu0
    %144 = vmatprep.subr.mxu0 %v43
    %145 = vmatpush1.msra.mxu0 %v42
    %146 = vmatprep.subr.mxu0 %v47
    %147 = vmatpush1.msra.mxu0 %v46
    %148 = vmatprep.subr.mxu0 %v51
    %149 = vmatpush1.msra.mxu0 %v50
    %150 = vmatprep.subr.mxu0 %v55
    %151 = vmatpush1.msra.mxu0 %v54
    %152 = vmatprep.subr.mxu0 %v59
    %153 = vmatpush1.msra.mxu0 %v58
    %154 = vmatprep.subr.mxu0 0.0
    %155 = vmatpush1.msra.mxu0 0.0
    %156 = vmatprep.subr.mxu0 0.0
    %157 = vmatpush1.msra.mxu0 0.0
    %158 = vmatprep.subr.mxu0 0.0
    %159 = vmatpush1.msra.mxu0 0.0
    %160 = vmatprep.subr.mxu0 0.0
    %161 = vmatpush1.msra.mxu0 0.0
    %162 = vmatprep.subr.mxu0 0.0
    %163 = vmatpush1.msra.mxu0 0.0
    %164 = vmatprep.subr.mxu0 0.0
    %165 = vmatpush1.msra.mxu0 0.0
    %166 = vmatprep.subr.mxu0 0.0
    %167 = vmatpush1.msra.mxu0 0.0
    %168 = vmatprep.subr.mxu0 0.0
    %169 = vmatpush1.msra.mxu0 0.0
    %170 = vmatprep.subr.mxu0 0.0
    %171 = vmatpush1.msra.mxu0 0.0
    %172 = vmatprep.subr.mxu0 0.0
    %173 = vmatpush1.msra.mxu0 0.0
    %174 = vmatprep.subr.mxu0 0.0
    %175 = vmatpush1.msra.mxu0 0.0
    %176 = vmatprep.subr.mxu0 0.0
    %177 = vmatpush1.msra.mxu0 0.0
    %178 = vmatprep.subr.mxu0 0.0
    %179 = vmatpush1.msra.mxu0 0.0
    %180 = vmatprep.subr.mxu0 0.0
    %181 = vmatpush1.msra.mxu0 0.0
    %182 = vmatprep.subr.mxu0 0.0
    %183 = vmatpush1.msra.mxu0 0.0
    %184 = vmatprep.subr.mxu0 0.0
    %185 = vmatpush1.msra.mxu0 0.0
    %186 = vmatprep.subr.mxu0 0.0
    %187 = vmatpush1.msra.mxu0 0.0
    %188 = vmatprep.subr.mxu0 0.0
    %189 = vmatpush1.msra.mxu0 0.0
    %190 = vmatprep.subr.mxu0 0.0
    %191 = vmatpush1.msra.mxu0 0.0
    %192 = vmatprep.subr.mxu0 0.0
    %193 = vmatpush1.msra.mxu0 0.0
    %194 = vmatprep.subr.mxu0 0.0
    %195 = vmatpush1.msra.mxu0 0.0
    %196 = vmatprep.subr.mxu0 0.0
    %197 = vmatpush1.msra.mxu0 0.0
    %198 = vmatprep.subr.mxu0 0.0
    %199 = vmatpush1.msra.mxu0 0.0
    %200 = vmatprep.subr.mxu0 0.0
    %201 = vmatpush1.msra.mxu0 0.0
    %202 = vmatprep.subr.mxu0 0.0
    %203 = vmatpush1.msra.mxu0 0.0
    %204 = vmatprep.subr.mxu0 0.0
    %205 = vmatpush1.msra.mxu0 0.0
    %206 = vmatprep.subr.mxu0 0.0
    %207 = vmatpush1.msra.mxu0 0.0
    %208 = vmatprep.mubr.f32.mxu0 0.0
    %209 = vmatmul.mubr.f32.gmra.mrb[0].mxu0 %v62
    %v210 = vpop.f32.mrb[0].mxu0
    %v211 = vadd.f32 0.0, %v210
    %v212 = vpop.f32.mrb[0].mxu0
    %v213 = vadd.f32 0.0, %v212
    %214 = vmatprep.mubr.f32.mxu0 0.0
    %215 = vmatmul.mubr.f32.gmra.mrb[0].mxu0 %v65
    %v216 = vpop.f32.mrb[0].mxu0
    %v217 = vadd.f32 0.0, %v216
    %v218 = vpop.f32.mrb[0].mxu0
    %v219 = vadd.f32 0.0, %v218
    %220 = vdwg.mxu0
    %v221 = vld [vmem:[%s2] sm:$0xff]
    %v222 = vld [vmem:[%s2 + $0x8] sm:$0x7f]
    %s223 = scalar_lea.vmem %s2, 16
    %v224 = vld [vmem:[%s223] sm:$0xff]
    %v225 = vld [vmem:[%s223 + $0x8] sm:$0x7f]
    %s226 = scalar_lea.vmem %s2, 32
    %v227 = vld [vmem:[%s226] sm:$0xff]
    %v228 = vld [vmem:[%s226 + $0x8] sm:$0x7f]
    %s229 = scalar_lea.vmem %s2, 48
    %v230 = vld [vmem:[%s229] sm:$0xff]
    %v231 = vld [vmem:[%s229 + $0x8] sm:$0x7f]
    %s232 = scalar_lea.vmem %s2, 64
    %v233 = vld [vmem:[%s232] sm:$0xff]
    %v234 = vld [vmem:[%s232 + $0x8] sm:$0x7f]
    %v235 = vxor.u32 %v134, 2147483648
    %v236 = vxor.u32 %v136, 2147483648
    %v237 = vxor.u32 %v211, 2147483648
    %v238 = vxor.u32 %v213, 2147483648
    %v239 = vxor.u32 %v140, 2147483648
    %v240 = vxor.u32 %v142, 2147483648
    %v241 = vxor.u32 %v217, 2147483648
    %v242 = vxor.u32 %v219, 2147483648
    %v243 = vmul.f32 %v235, 1.442695
    %v244 = vpow.pop %v243
    %v245 = vmul.f32 %v236, 1.442695
    %v246 = vpow.pop %v245
    %v247 = vmul.f32 %v237, 1.442695
    %v248 = vpow.pop %v247
    %v249 = vmul.f32 %v238, 1.442695
    %v250 = vpow.pop %v249
    %v251 = vmul.f32 %v239, 1.442695
    %v252 = vpow.pop %v251
    %v253 = vmul.f32 %v240, 1.442695
    %v254 = vpow.pop %v253
    %v255 = vmul.f32 %v241, 1.442695
    %v256 = vpow.pop %v255
    %v257 = vmul.f32 %v242, 1.442695
    %v258 = vpow.pop %v257
    %v259 = vadd.f32 %v244, 1.0
    %v260 = vadd.f32 %v246, 1.0
    %v261 = vadd.f32 %v248, 1.0
    %v262 = vadd.f32 %v250, 1.0
    %v263 = vadd.f32 %v252, 1.0
    %v264 = vadd.f32 %v254, 1.0
    %v265 = vadd.f32 %v256, 1.0
    %v266 = vadd.f32 %v258, 1.0
    %v267 = vrcp.pop %v259
    %v268 = vmul.f32 1.0, %v267
    %v269 = vrcp.pop %v260
    %v270 = vmul.f32 1.0, %v269
    %v271 = vrcp.pop %v261
    %v272 = vmul.f32 1.0, %v271
    %v273 = vrcp.pop %v262
    %v274 = vmul.f32 1.0, %v273
    %v275 = vrcp.pop %v263
    %v276 = vmul.f32 1.0, %v275
    %v277 = vrcp.pop %v264
    %v278 = vmul.f32 1.0, %v277
    %v279 = vrcp.pop %v265
    %v280 = vmul.f32 1.0, %v279
    %v281 = vrcp.pop %v266
    %v282 = vmul.f32 1.0, %v281
    %v283 = vsub.f32 1.0, %v233
    %v284 = vsub.f32 1.0, %v234
    %286 = vset.pattern.permute.xlu0 0
    %287 = vperm.xlu0 %286, %v283
    %v288 = vpop.permute.xlu0 %287
    %291 = vset.pattern.permute.xlu0 0
    %292 = vperm.xlu0 %291, %v284
    %v293 = vpop.permute.xlu0 %292
    %v295 = vmul.f32 %v134, %v288
    %v296 = vmul.f32 %v136, %v288
    %v297 = vmul.f32 %v211, %v288
    %v298 = vmul.f32 %v213, %v288
    %v299 = vmul.f32 %v140, %v293
    %v300 = vmul.f32 %v142, %v293
    %v301 = vmul.f32 %v217, %v293
    %v302 = vmul.f32 %v219, %v293
    %v303 = vmul.f32 %v295, 1.442695
    %v304 = vpow.pop %v303
    %v305 = vmul.f32 %v296, 1.442695
    %v306 = vpow.pop %v305
    %v307 = vmul.f32 %v297, 1.442695
    %v308 = vpow.pop %v307
    %v309 = vmul.f32 %v298, 1.442695
    %v310 = vpow.pop %v309
    %v311 = vmul.f32 %v299, 1.442695
    %v312 = vpow.pop %v311
    %v313 = vmul.f32 %v300, 1.442695
    %v314 = vpow.pop %v313
    %v315 = vmul.f32 %v301, 1.442695
    %v316 = vpow.pop %v315
    %v317 = vmul.f32 %v302, 1.442695
    %v318 = vpow.pop %v317
    %vm319 = vcmp.gt.f32.partialorder %v233, 0.5
    %vm320 = vcmp.gt.f32.partialorder %v234, 0.5
    %v321 = vsel %vm319, 1, 0
    %v322 = vsel %vm320, 1, 0
    %323 = vset.pattern.permute.xlu0 0
    %324 = vperm.xlu0 %323, %v321
    %v325 = vpop.permute.xlu0 %324
    %326 = vset.pattern.permute.xlu0 0
    %327 = vperm.xlu0 %326, %v322
    %v328 = vpop.permute.xlu0 %327
    %vm329 = vcmp.eq.s32.totalorder %v325, 1
    %vm330 = vcmp.eq.s32.totalorder %v328, 1
    %v331 = vsel %vm329, %v268, %v134
    %v332 = vsel %vm329, %v270, %v136
    %v333 = vsel %vm329, %v272, %v211
    %v334 = vsel %vm329, %v274, %v213
    %v335 = vsel %vm330, %v276, %v140
    %v336 = vsel %vm330, %v278, %v142
    %v337 = vsel %vm330, %v280, %v217
    %v338 = vsel %vm330, %v282, %v219
    %339 = vst [vmem:[#allocation5] sm:$0xff] %v331
    %340 = vst [vmem:[#allocation5 + $0x8] sm:$0xff] %v332
    %341 = vst [vmem:[#allocation5 + $0x10] sm:$0xff] %v333
    %342 = vst [vmem:[#allocation5 + $0x18] sm:$0xff] %v334
    %343 = vst [vmem:[#allocation5 + $0x20] sm:$0x7f] %v335
    %344 = vst [vmem:[#allocation5 + $0x28] sm:$0x7f] %v336
    %345 = vst [vmem:[#allocation5 + $0x30] sm:$0x7f] %v337
    %346 = vst [vmem:[#allocation5 + $0x38] sm:$0x7f] %v338
    %348 = vset.pattern.permute.xlu0 0
    %349 = vperm.xlu0 %348, %v221
    %v350 = vpop.permute.xlu0 %349
    %353 = vset.pattern.permute.xlu0 0
    %354 = vperm.xlu0 %353, %v222
    %v355 = vpop.permute.xlu0 %354
    %v357 = vmul.f32 %v268, %v350
    %v358 = vmul.f32 %v270, %v350
    %v359 = vmul.f32 %v272, %v350
    %v360 = vmul.f32 %v274, %v350
    %v361 = vmul.f32 %v276, %v355
    %v362 = vmul.f32 %v278, %v355
    %v363 = vmul.f32 %v280, %v355
    %v364 = vmul.f32 %v282, %v355
    %366 = vset.pattern.permute.xlu0 0
    %367 = vperm.xlu0 %366, %v224
    %v368 = vpop.permute.xlu0 %367
    %371 = vset.pattern.permute.xlu0 0
    %372 = vperm.xlu0 %371, %v225
    %v373 = vpop.permute.xlu0 %372
    %v375 = vmul.f32 %v304, %v368
    %v376 = vmul.f32 %v306, %v368
    %v377 = vmul.f32 %v308, %v368
    %v378 = vmul.f32 %v310, %v368
    %v379 = vmul.f32 %v312, %v373
    %v380 = vmul.f32 %v314, %v373
    %v381 = vmul.f32 %v316, %v373
    %v382 = vmul.f32 %v318, %v373
    %v383 = vadd.f32 %v357, %v375
    %v384 = vadd.f32 %v358, %v376
    %v385 = vadd.f32 %v359, %v377
    %v386 = vadd.f32 %v360, %v378
    %v387 = vadd.f32 %v361, %v379
    %v388 = vadd.f32 %v362, %v380
    %v389 = vadd.f32 %v363, %v381
    %v390 = vadd.f32 %v364, %v382
    %v391 = vld [vmem:[%s3] sm:$0xf]
    %v393 = vlaneseq
    %v394 = vshrl.u32 %v393, 7
    %v395 = vsub.s32 0, %v394
    %v396 = vrot.slane %v391, %v395
    %v397 = vlaneseq
    %v398 = vshrl.u32 %v397, 7
    %v399 = vsub.s32 1, %v398
    %v400 = vrot.slane %v391, %v399
    %v401 = vlaneseq
    %v402 = vshrl.u32 %v401, 7
    %v403 = vsub.s32 2, %v402
    %v404 = vrot.slane %v391, %v403
    %v405 = vlaneseq
    %v406 = vshrl.u32 %v405, 7
    %v407 = vsub.s32 3, %v406
    %v408 = vrot.slane %v391, %v407
    %414 = vset.pattern.permute.xlu0 0
    %415 = vperm.xlu0 %414, %v227
    %v416 = vpop.permute.xlu0 %415
    %419 = vset.pattern.permute.xlu0 0
    %420 = vperm.xlu0 %419, %v228
    %v421 = vpop.permute.xlu0 %420
    %v423 = vmul.f32 %v396, %v416
    %v424 = vmul.f32 %v400, %v416
    %v425 = vmul.f32 %v404, %v416
    %v426 = vmul.f32 %v408, %v416
    %v427 = vmul.f32 %v396, %v421
    %v428 = vmul.f32 %v400, %v421
    %v429 = vmul.f32 %v404, %v421
    %v430 = vmul.f32 %v408, %v421
    %v431 = vadd.f32 %v383, %v423
    %v432 = vadd.f32 %v384, %v424
    %v433 = vadd.f32 %v385, %v425
    %v434 = vadd.f32 %v386, %v426
    %v435 = vadd.f32 %v387, %v427
    %v436 = vadd.f32 %v388, %v428
    %v437 = vadd.f32 %v389, %v429
    %v438 = vadd.f32 %v390, %v430
    %v439 = vld [vmem:[%s4] sm:$0xf]
    %v441 = vlaneseq
    %v442 = vshrl.u32 %v441, 7
    %v443 = vsub.s32 0, %v442
    %v444 = vrot.slane %v439, %v443
    %v445 = vlaneseq
    %v446 = vshrl.u32 %v445, 7
    %v447 = vsub.s32 1, %v446
    %v448 = vrot.slane %v439, %v447
    %v449 = vlaneseq
    %v450 = vshrl.u32 %v449, 7
    %v451 = vsub.s32 2, %v450
    %v452 = vrot.slane %v439, %v451
    %v453 = vlaneseq
    %v454 = vshrl.u32 %v453, 7
    %v455 = vsub.s32 3, %v454
    %v456 = vrot.slane %v439, %v455
    %462 = vset.pattern.permute.xlu0 0
    %463 = vperm.xlu0 %462, %v230
    %v464 = vpop.permute.xlu0 %463
    %467 = vset.pattern.permute.xlu0 0
    %468 = vperm.xlu0 %467, %v231
    %v469 = vpop.permute.xlu0 %468
    %v471 = vmul.f32 %v444, %v464
    %v472 = vmul.f32 %v448, %v464
    %v473 = vmul.f32 %v452, %v464
    %v474 = vmul.f32 %v456, %v464
    %v475 = vmul.f32 %v444, %v469
    %v476 = vmul.f32 %v448, %v469
    %v477 = vmul.f32 %v452, %v469
    %v478 = vmul.f32 %v456, %v469
    %v479 = vadd.f32 %v431, %v471
    %v480 = vadd.f32 %v432, %v472
    %v481 = vadd.f32 %v433, %v473
    %v482 = vadd.f32 %v434, %v474
    %v483 = vadd.f32 %v435, %v475
    %v484 = vadd.f32 %v436, %v476
    %v485 = vadd.f32 %v437, %v477
    %v486 = vadd.f32 %v438, %v478
    %487 = vst [vmem:[#allocation6] sm:$0xff] %v479
    %488 = vst [vmem:[#allocation6 + $0x8] sm:$0xff] %v480
    %489 = vst [vmem:[#allocation6 + $0x10] sm:$0xff] %v481
    %490 = vst [vmem:[#allocation6 + $0x18] sm:$0xff] %v482
    %491 = vst [vmem:[#allocation6 + $0x20] sm:$0x7f] %v483
    %492 = vst [vmem:[#allocation6 + $0x28] sm:$0x7f] %v484
    %493 = vst [vmem:[#allocation6 + $0x30] sm:$0x7f] %v485
    %494 = vst [vmem:[#allocation6 + $0x38] sm:$0x7f] %v486
    // Predicated region
    $region26: #{tpu_custom_call.1} parent=1 // pred_check
      _
    $region27: #{tpu_custom_call.1} parent=1 // pred_check_branch
      %496 = sbr.rel (0) target = $region29
    $region28: #{tpu_custom_call.1} parent=1 // pred_region
      %s498 = ssub.s32 1024, 1024
      %499 = vsyncadd [#allocation4], %s498
      %s500 = sshll.u32 [#allocation5], 4
      %s501 = int_to_ptr.vmem [resolvable:$true] %s500
      %506 = dma.vmem_to_hbm [thread:$0]  %s501, 1024, %s5, [#allocation4], 512, 512, 32
    $region29: #{tpu_custom_call.1} parent=1 // pred_fallthru
      _
    // Predicated region
    $region30: #{tpu_custom_call.1} parent=1 // pred_check
      _
    $region31: #{tpu_custom_call.1} parent=1 // pred_check_branch
      %508 = sbr.rel (0) target = $region33
    $region32: #{tpu_custom_call.1} parent=1 // pred_region
      %s510 = ssub.s32 1024, 1024
      %511 = vsyncadd [#allocation7], %s510
      %s512 = sshll.u32 [#allocation6], 4
      %s513 = int_to_ptr.vmem [resolvable:$true] %s512
      %518 = dma.vmem_to_hbm [thread:$0]  %s513, 1024, %s6, [#allocation7], 512, 512, 32
    $region33: #{tpu_custom_call.1} parent=1 // pred_fallthru
      _
    // Predicated region
    $region34: #{tpu_custom_call.1} parent=1 // pred_check
      _
    $region35: #{tpu_custom_call.1} parent=1 // pred_check_branch
      %520 = sbr.rel (0) target = $region37
    $region36: #{tpu_custom_call.1} parent=1 // pred_region
      %521 = dma.done [#allocation4], 1024
    $region37: #{tpu_custom_call.1} parent=1 // pred_fallthru
      _
    // Predicated region
    $region38: #{tpu_custom_call.1} parent=1 // pred_check
      _
    $region39: #{tpu_custom_call.1} parent=1 // pred_check_branch
      %523 = sbr.rel (0) target = $region41
    $region40: #{tpu_custom_call.1} parent=1 // pred_region
      %524 = dma.done [#allocation7], 1024
    $region41: #{tpu_custom_call.1} parent=1 // pred_fallthru
      _
    %525 = vsyncpa [#allocation3], 1
    %526 = vsyncpa [#allocation4], 1
    %527 = vsyncpa [#allocation7], 1

</llo_original>
